<compile_context>
chip_gen: v7x
topology: tpu7x:2x2x1
jax: 0.10.0
libtpu: 0.0.40
codegen_flags: <defaults>
</compile_context>

<pallas_src>
import functools
import math

import jax
import jax.numpy as jnp
from jax import lax
from jax.experimental import pallas as pl
from jax.experimental.pallas import tpu as pltpu

_LANE = 128


def _round_up(x, m):
    return (x + m - 1) // m * m


def _ls_kl_kernel(logp_ref, tgt_ref, loss_ref, *, confidence, smoothing_value,
                  ignore_index, pad_col, const_ent, tile_v, vocab_size,
                  num_v_blocks):
    j = pl.program_id(1)                                 # vocab (reduction) axis

    tgt = tgt_ref[...]                                   # (tb, 1) int32
    not_pad = tgt != ignore_index                        # RAW compare (PyTorch semantics)

    # Per-row constant entropy term, counted exactly once (first vocab tile).
    @pl.when(j == 0)
    def _init():
        loss_ref[...] = jnp.where(not_pad, const_ent, 0.0)

    logp = logp_ref[...].astype(jnp.float32)             # native-dtype load, cast in-register
    tb, tv = logp.shape
    col = lax.broadcasted_iota(jnp.int32, (tb, tv), 1)   # local lane index (no per-elem offset add)
    tgt_local = tgt - j * tile_v                         # (tb, 1): offset folded on scalar side

    def accumulate(lp):
        # Single fused weighted lane-reduction per tile:
        #   sum_v lp * where(v == tgt, -confidence, -smoothing_value)
        #     == -sv * row_sum + (sv - conf) * lp[tgt]
        coeff = jnp.where(col == tgt_local, -confidence, -smoothing_value)
        partial = jnp.sum(coeff * lp, axis=1, keepdims=True)          # (tb, 1)
        loss_ref[...] += jnp.where(not_pad, partial, 0.0)

    ragged = vocab_size % tile_v
    if ragged:
        last = num_v_blocks - 1

        @pl.when(j == last)
        def _ragged_tile():                              # mask garbage lanes past V
            accumulate(jnp.where(col < ragged, logp, 0.0))

        @pl.when(j != last)
        def _full_tile():
            accumulate(logp)
    else:
        accumulate(logp)

    # Padding-column correction (+ sv * logp[:, pad_col]) only in the ONE vocab
    # tile that contains it (removes ~3 VALU ops/vreg from every other tile).
    @pl.when(j == pad_col // tile_v)
    def _pad_col_tile():
        pad_lp = jnp.sum(jnp.where(col == pad_col % tile_v, logp, 0.0),
                         axis=1, keepdims=True)
        loss_ref[...] += jnp.where(not_pad, smoothing_value * pad_lp, 0.0)


def _select_tiles(B, V, itemsize, tb, tv, vmem_budget_bytes):
    sub = {4: 8, 2: 16, 1: 32}.get(itemsize, 8)          # sublane-packing minimum
    if tb is None:
        # aim for >= 8 batch tiles (keeps both v7x TensorCores fed), never below
        # the dtype packing minimum, never above 256 rows.
        tb = min(256, max(sub, _round_up(pl.cdiv(B, 8), sub)))
        tb = min(tb, _round_up(B, sub))
    assert tb > 0 and tb % sub == 0, f"tb must be a positive multiple of {sub} for this dtype"
    if tv is None:
        per_buf = max(vmem_budget_bytes // 2, tb * _LANE * itemsize)   # double-buffered input
        tv = (per_buf // (tb * itemsize)) // _LANE * _LANE
        tv = max(_LANE, min(tv, _round_up(V, _LANE)))
    assert tv > 0 and tv % _LANE == 0, "tv must be a positive multiple of 128"
    return tb, tv


def label_smoothing_loss(output, target, *, label_smoothing, tgt_vocab_size,
                         ignore_index=-100, tb=None, tv=None,
                         vmem_budget_bytes=8 * 1024 * 1024):
    """output: (B, V) float log-probabilities (any float dtype); target: (B,) ints."""
    B, V = output.shape
    assert V == tgt_vocab_size
    assert 0.0 < label_smoothing <= 1.0
    assert tgt_vocab_size > 2, "label smoothing needs tgt_vocab_size > 2"

    confidence = 1.0 - label_smoothing
    smoothing_value = label_smoothing / (tgt_vocab_size - 2)
    # PyTorch buffer indexing wraps a negative ignore_index for the zeroed column,
    # while the row mask compares against the RAW value (so a raw-negative
    # ignore_index never masks a row, since targets are non-negative).
    pad_col = ignore_index % tgt_vocab_size
    # TODO(synk): if ignore_index is negative and a target equals the wrapped
    # column (target == V + ignore_index), the constant-entropy term below assumes
    # target != pad column; that obscure corner diverges slightly from PyTorch.
    const_ent = (
        (confidence * math.log(confidence) if confidence > 0.0 else 0.0)
        + ((tgt_vocab_size - 2) * smoothing_value * math.log(smoothing_value)
           if smoothing_value > 0.0 else 0.0))

    itemsize = jnp.dtype(output.dtype).itemsize
    tb, tv = _select_tiles(B, V, itemsize, tb, tv, vmem_budget_bytes)
    grid = (pl.cdiv(B, tb), pl.cdiv(V, tv))      # batch parallel, vocab = trailing reduction

    tgt2d = target.reshape(B, 1).astype(jnp.int32)

    kernel = functools.partial(
        _ls_kl_kernel,
        confidence=float(confidence),
        smoothing_value=float(smoothing_value),
        ignore_index=int(ignore_index),
        pad_col=int(pad_col),
        const_ent=float(const_ent),
        tile_v=int(tv),
        vocab_size=int(V),
        num_v_blocks=int(grid[1]),
    )

    vmem_need = 2 * tb * tv * itemsize + 4 * tb * 4 + (1 << 20)

    per_row = pl.pallas_call(
        kernel,
        out_shape=jax.ShapeDtypeStruct((B, 1), jnp.float32),
        grid_spec=pltpu.PrefetchScalarGridSpec(
            num_scalar_prefetch=0,
            grid=grid,
            in_specs=[
                pl.BlockSpec((tb, tv), lambda i, j: (i, j)),   # log-prob tile (native dtype)
                pl.BlockSpec((tb, 1), lambda i, j: (i, 0)),    # targets, resident over j
            ],
            out_specs=pl.BlockSpec((tb, 1), lambda i, j: (i, 0)),  # per-row accumulator
        ),
        compiler_params=pltpu.CompilerParams(
            dimension_semantics=("parallel", "arbitrary"),
            vmem_limit_bytes=int(max(vmem_need, 32 * 1024 * 1024)),
        ),
        cost_estimate=pl.CostEstimate(
            flops=4 * B * V,
            transcendentals=0,
            bytes_accessed=B * V * itemsize + 2 * B * 4),
    )(output, tgt2d)
    return jnp.sum(per_row)


def _reference(output, target, *, label_smoothing, tgt_vocab_size, ignore_index):
    """Pure-JAX mirror of the PyTorch forward, for verification."""
    B, V = output.shape
    confidence = 1.0 - label_smoothing
    sv = label_smoothing / (tgt_vocab_size - 2)
    pad_col = ignore_index % V                       # torch buffer indexing wraps negatives
    one_hot = jnp.full((V,), sv, dtype=jnp.float32).at[pad_col].set(0.0)
    p = jnp.tile(one_hot[None, :], (B, 1))
    p = p.at[jnp.arange(B), target].set(confidence)
    p = jnp.where((target == ignore_index)[:, None], 0.0, p)   # raw compare, like torch
    logp = output.astype(jnp.float32)
    elem = jnp.where(p > 0.0, p * (jnp.log(jnp.where(p > 0.0, p, 1.0)) - logp), 0.0)
    return jnp.sum(elem)


if __name__ == "__main__":
    key = jax.random.PRNGKey(0)
    k_logits, k_tgt = jax.random.split(key)

    B = 16
    V = 500              # not a multiple of 128: exercises the ragged-tile mask
    LABEL_SMOOTHING = 0.1
    IGNORE_INDEX = 0     # padding token index

    logits = jax.random.normal(k_logits, (B, V), dtype=jnp.float32)
    output = jax.nn.log_softmax(logits, axis=-1)          # model log-probabilities
    target = jax.random.randint(k_tgt, (B,), 0, V, dtype=jnp.int32)
    target = target.at[3].set(IGNORE_INDEX).at[11].set(IGNORE_INDEX)

    # 1) f32 with small explicit tiles: real (2, 4) grid, ragged last vocab tile,
    #    pad column in tile 0.
    loss = label_smoothing_loss(
        output, target, label_smoothing=LABEL_SMOOTHING, tgt_vocab_size=V,
        ignore_index=IGNORE_INDEX, tb=8, tv=128)
    loss = jax.block_until_ready(loss)
    ref = _reference(output, target, label_smoothing=LABEL_SMOOTHING,
                     tgt_vocab_size=V, ignore_index=IGNORE_INDEX)
    assert jnp.allclose(loss, ref, rtol=1e-5, atol=1e-5), (loss, ref)

    # 2) bf16 input fed straight to the kernel (no wrapper pre-cast), auto tiles
    #    (tb snaps to the bf16 sublane minimum of 16).
    out_bf16 = output.astype(jnp.bfloat16)
    loss_bf = label_smoothing_loss(
        out_bf16, target, label_smoothing=LABEL_SMOOTHING, tgt_vocab_size=V,
        ignore_index=IGNORE_INDEX)
    loss_bf = jax.block_until_ready(loss_bf)
    ref_bf = _reference(out_bf16.astype(jnp.float32), target,
                        label_smoothing=LABEL_SMOOTHING, tgt_vocab_size=V,
                        ignore_index=IGNORE_INDEX)
    assert jnp.allclose(loss_bf, ref_bf, rtol=1e-3, atol=1e-3), (loss_bf, ref_bf)

    # 3) PyTorch-default negative ignore_index (-100): column V-100 is zeroed,
    #    no rows masked. Avoid the documented target==wrapped-column corner case.
    target_neg = jnp.where(target == (V - 100), jnp.int32(7), target)
    loss_neg = label_smoothing_loss(
        output, target_neg, label_smoothing=LABEL_SMOOTHING, tgt_vocab_size=V,
        ignore_index=-100)
    loss_neg = jax.block_until_ready(loss_neg)
    ref_neg = _reference(output, target_neg, label_smoothing=LABEL_SMOOTHING,
                         tgt_vocab_size=V, ignore_index=-100)
    assert jnp.allclose(loss_neg, ref_neg, rtol=1e-5, atol=1e-5), (loss_neg, ref_neg)

    print("KERNEL_OK")
</pallas_src>

<mosaic_0001>
module attributes {stable_mosaic.version = 11 : i64} {
  func.func @_ls_kl_kernel(%arg0: i32, %arg1: i32, %arg2: memref<8x128xf32, #tpu.memory_space<vmem>>, %arg3: memref<8x1xi32, #tpu.memory_space<vmem>>, %arg4: memref<8x1xf32, #tpu.memory_space<vmem>>) attributes {dimension_semantics = [#tpu.dimension_semantics<parallel>, #tpu.dimension_semantics<arbitrary>], iteration_bounds = array<i64: 2, 4>, scalar_prefetch = 0 : i64, scratch_operands = 0 : i64, tpu.core_type = #tpu.core_type<tc>, window_params = [{transform_indices = @transform_0, window_bounds = array<i64: 8, 128>}, {transform_indices = @transform_1, window_bounds = array<i64: 8, 1>}, {transform_indices = @transform_2, window_bounds = array<i64: 8, 1>}]} {
    %c0 = arith.constant 0 : index
    %c0_0 = arith.constant 0 : index
    %0 = vector.load %arg3[%c0, %c0_0] : memref<8x1xi32, #tpu.memory_space<vmem>>, vector<8x1xi32>
    %c0_i32 = arith.constant 0 : i32
    %1 = vector.broadcast %c0_i32 : i32 to vector<8x1xi32>
    %2 = arith.cmpi ne, %0, %1 : vector<8x1xi32>
    %c0_i32_1 = arith.constant 0 : i32
    %3 = arith.cmpi eq, %arg1, %c0_i32_1 : i32
    %4 = arith.extui %3 : i1 to i32
    %c0_i32_2 = arith.constant 0 : i32
    %5 = arith.cmpi ne, %4, %c0_i32_2 : i32
    scf.if %5 {
      %cst = arith.constant -0.946142971 : f32
      %cst_10 = arith.constant 0.000000e+00 : f32
      %20 = vector.broadcast %cst : f32 to vector<8x1xf32>
      %21 = vector.broadcast %cst_10 : f32 to vector<8x1xf32>
      %22 = arith.select %2, %20, %21 : vector<8x1xi1>, vector<8x1xf32>
      %c0_11 = arith.constant 0 : index
      %c0_12 = arith.constant 0 : index
      %23 = vector.load %arg4[%c0_11, %c0_12] : memref<8x1xf32, #tpu.memory_space<vmem>>, vector<8x1xf32>
      tpu.vector_store %arg4[%c0_11, %c0_12], %22 {strides = array<i32>} : memref<8x1xf32, #tpu.memory_space<vmem>>, vector<8x1xf32>,
    } else {
    }
    %c0_3 = arith.constant 0 : index
    %c0_4 = arith.constant 0 : index
    %6 = vector.load %arg2[%c0_3, %c0_4] : memref<8x128xf32, #tpu.memory_space<vmem>>, vector<8x128xf32>
    %7 = tpu.iota {dimensions = array<i32: 1>} : vector<8x128xi32>
    %c128_i32 = arith.constant 128 : i32
    %8 = arith.muli %arg1, %c128_i32 : i32
    %9 = vector.broadcast %8 : i32 to vector<8x1xi32>
    %10 = arith.subi %0, %9 : vector<8x1xi32>
    %c3_i32 = arith.constant 3 : i32
    %11 = arith.cmpi eq, %arg1, %c3_i32 : i32
    %12 = arith.extui %11 : i1 to i32
    %c0_i32_5 = arith.constant 0 : i32
    %13 = arith.cmpi ne, %12, %c0_i32_5 : i32
    scf.if %13 {
      %c116_i32 = arith.constant 116 : i32
      %20 = vector.broadcast %c116_i32 : i32 to vector<8x128xi32>
      %21 = arith.cmpi slt, %7, %20 : vector<8x128xi32>
      %cst = arith.constant 0.000000e+00 : f32
      %22 = vector.broadcast %cst : f32 to vector<8x128xf32>
      %23 = arith.select %21, %6, %22 : vector<8x128xi1>, vector<8x128xf32>
      %24 = vector.broadcast %10 : vector<8x1xi32> to vector<8x128xi32>
      %25 = arith.cmpi eq, %7, %24 : vector<8x128xi32>
      %cst_10 = arith.constant -0.899999976 : f32
      %cst_11 = arith.constant -2.00803217E-4 : f32
      %26 = vector.broadcast %cst_10 : f32 to vector<8x128xf32>
      %27 = vector.broadcast %cst_11 : f32 to vector<8x128xf32>
      %28 = arith.select %25, %26, %27 : vector<8x128xi1>, vector<8x128xf32>
      %29 = arith.mulf %28, %23 : vector<8x128xf32>
      %cst_12 = arith.constant dense<0.000000e+00> : vector<8xf32>
      %30 = vector.multi_reduction <add>, %29, %cst_12 [1] : vector<8x128xf32> to vector<8xf32>
      %31 = vector.shape_cast %30 : vector<8xf32> to vector<8x1xf32>
      %c0_13 = arith.constant 0 : index
      %c0_14 = arith.constant 0 : index
      %32 = vector.load %arg4[%c0_13, %c0_14] : memref<8x1xf32, #tpu.memory_space<vmem>>, vector<8x1xf32>
      %cst_15 = arith.constant 0.000000e+00 : f32
      %33 = vector.broadcast %cst_15 : f32 to vector<8x1xf32>
      %34 = arith.select %2, %31, %33 : vector<8x1xi1>, vector<8x1xf32>
      %35 = arith.addf %32, %34 : vector<8x1xf32>
      %c0_16 = arith.constant 0 : index
      %c0_17 = arith.constant 0 : index
      %36 = vector.load %arg4[%c0_16, %c0_17] : memref<8x1xf32, #tpu.memory_space<vmem>>, vector<8x1xf32>
      tpu.vector_store %arg4[%c0_16, %c0_17], %35 {strides = array<i32>} : memref<8x1xf32, #tpu.memory_space<vmem>>, vector<8x1xf32>,
    } else {
    }
    %c3_i32_6 = arith.constant 3 : i32
    %14 = arith.cmpi ne, %arg1, %c3_i32_6 : i32
    %15 = arith.extui %14 : i1 to i32
    %c0_i32_7 = arith.constant 0 : i32
    %16 = arith.cmpi ne, %15, %c0_i32_7 : i32
    scf.if %16 {
      %20 = vector.broadcast %10 : vector<8x1xi32> to vector<8x128xi32>
      %21 = arith.cmpi eq, %7, %20 : vector<8x128xi32>
      %cst = arith.constant -0.899999976 : f32
      %cst_10 = arith.constant -2.00803217E-4 : f32
      %22 = vector.broadcast %cst : f32 to vector<8x128xf32>
      %23 = vector.broadcast %cst_10 : f32 to vector<8x128xf32>
      %24 = arith.select %21, %22, %23 : vector<8x128xi1>, vector<8x128xf32>
      %25 = arith.mulf %24, %6 : vector<8x128xf32>
      %cst_11 = arith.constant dense<0.000000e+00> : vector<8xf32>
      %26 = vector.multi_reduction <add>, %25, %cst_11 [1] : vector<8x128xf32> to vector<8xf32>
      %27 = vector.shape_cast %26 : vector<8xf32> to vector<8x1xf32>
      %c0_12 = arith.constant 0 : index
      %c0_13 = arith.constant 0 : index
      %28 = vector.load %arg4[%c0_12, %c0_13] : memref<8x1xf32, #tpu.memory_space<vmem>>, vector<8x1xf32>
      %cst_14 = arith.constant 0.000000e+00 : f32
      %29 = vector.broadcast %cst_14 : f32 to vector<8x1xf32>
      %30 = arith.select %2, %27, %29 : vector<8x1xi1>, vector<8x1xf32>
      %31 = arith.addf %28, %30 : vector<8x1xf32>
      %c0_15 = arith.constant 0 : index
      %c0_16 = arith.constant 0 : index
      %32 = vector.load %arg4[%c0_15, %c0_16] : memref<8x1xf32, #tpu.memory_space<vmem>>, vector<8x1xf32>
      tpu.vector_store %arg4[%c0_15, %c0_16], %31 {strides = array<i32>} : memref<8x1xf32, #tpu.memory_space<vmem>>, vector<8x1xf32>,
    } else {
    }
    %c0_i32_8 = arith.constant 0 : i32
    %17 = arith.cmpi eq, %arg1, %c0_i32_8 : i32
    %18 = arith.extui %17 : i1 to i32
    %c0_i32_9 = arith.constant 0 : i32
    %19 = arith.cmpi ne, %18, %c0_i32_9 : i32
    scf.if %19 {
      %c0_i32_10 = arith.constant 0 : i32
      %20 = vector.broadcast %c0_i32_10 : i32 to vector<8x128xi32>
      %21 = arith.cmpi eq, %7, %20 : vector<8x128xi32>
      %cst = arith.constant 0.000000e+00 : f32
      %22 = vector.broadcast %cst : f32 to vector<8x128xf32>
      %23 = arith.select %21, %6, %22 : vector<8x128xi1>, vector<8x128xf32>
      %cst_11 = arith.constant dense<0.000000e+00> : vector<8xf32>
      %24 = vector.multi_reduction <add>, %23, %cst_11 [1] : vector<8x128xf32> to vector<8xf32>
      %25 = vector.shape_cast %24 : vector<8xf32> to vector<8x1xf32>
      %c0_12 = arith.constant 0 : index
      %c0_13 = arith.constant 0 : index
      %26 = vector.load %arg4[%c0_12, %c0_13] : memref<8x1xf32, #tpu.memory_space<vmem>>, vector<8x1xf32>
      %cst_14 = arith.constant 2.00803217E-4 : f32
      %27 = vector.broadcast %cst_14 : f32 to vector<8x1xf32>
      %28 = arith.mulf %27, %25 : vector<8x1xf32>
      %cst_15 = arith.constant 0.000000e+00 : f32
      %29 = vector.broadcast %cst_15 : f32 to vector<8x1xf32>
      %30 = arith.select %2, %28, %29 : vector<8x1xi1>, vector<8x1xf32>
      %31 = arith.addf %26, %30 : vector<8x1xf32>
      %c0_16 = arith.constant 0 : index
      %c0_17 = arith.constant 0 : index
      %32 = vector.load %arg4[%c0_16, %c0_17] : memref<8x1xf32, #tpu.memory_space<vmem>>, vector<8x1xf32>
      tpu.vector_store %arg4[%c0_16, %c0_17], %31 {strides = array<i32>} : memref<8x1xf32, #tpu.memory_space<vmem>>, vector<8x1xf32>,
    } else {
    }
    return
  }
  func.func @transform_0(%arg0: i32, %arg1: i32) -> (i32, i32) {
    %c0_i32 = arith.constant 0 : i32
    return %arg0, %arg1 : i32, i32
  }
  func.func @transform_1(%arg0: i32, %arg1: i32) -> (i32, i32) {
    %c0_i32 = arith.constant 0 : i32
    %c0_i32_0 = arith.constant 0 : i32
    return %arg0, %c0_i32 : i32, i32
  }
  func.func @transform_2(%arg0: i32, %arg1: i32) -> (i32, i32) {
    %c0_i32 = arith.constant 0 : i32
    %c0_i32_0 = arith.constant 0 : i32
    return %arg0, %c0_i32 : i32, i32
  }
}

</mosaic_0001>

<llo_original>
// kernel: tpu_custom_call.1
$region0: #{tpu_custom_call.1}
  #allocation0 [shape = 'u32[]', space=smem, size = 0x4, offset = 0x4, fixed_abs, tag = 'smem constant byte address 0x4 - core index']
  #allocation1 [shape = 'u32[144,128]{1,0:T(1,128)}', space=vmem, size = 0x12000, scoped, tag = 'internal scratch']
  %s0 = inlined_call_operand.hbm [shape: f32[16,500], index: 0, kind: input, shape index: {}]
  %s1 = inlined_call_operand.vmem [shape: s32[16,1], index: 1, kind: input, shape index: {}]
  %s2 = inlined_call_operand.vmem [shape: f32[16,1], index: 2, kind: output, shape index: {}]
  %s3 = sld [smem:[#allocation0]]
  $region61: #{tpu_custom_call.1} parent=0
    _
  %s5 = ssub.s32 1, %s3
  %s6 = scalar_select 0, %s5, %s3
  $region1: #{tpu_custom_call.1} parent=0
    #allocation2 [shape = 'u8[8192]{0}', space=vmem, size = 0x2000, scoped, tag = 'input window, operand 0']
    #allocation3 [shape = 's32[2]{0}', space=sflag, size = 0x8, scoped, tag = 'scoped memory for tpu_custom_call.1']
    %7 = vsyncpa [#allocation3], 0
    %s8 = scalar_lea.sflag [#allocation3], 1
    %9 = vsyncpa %s8, 0
    loop: start=0, step=1, limit=10
    $region2: #{tpu_custom_call.1} parent=1 // loop_pre_header
      _
    $region3: #{tpu_custom_call.1} parent=1 // loop_header
      %s11 = sphi 0, %s15
      %p12 = scmp.ge.s32.totalorder %s11, 10
      %s18 = sphi 0, %s30
      %s19 = sphi 0, %s26
      %s20 = sphi 0, %s18
      %s21 = sphi 0, %s19
      %s22 = sphi 0, %s20
      %s23 = sphi 0, %s21
      %s35 = sphi 0, %s37
      %s38 = sphi 0, %s35
      %s39 = sphi 0, %s38
      %s55 = sphi 0, %s39
      %s61 = sphi 0, %s63
      %s64 = sphi 0, %s61
      %s65 = sphi 0, %s64
      %s81 = sphi 0, %s65
      %s87 = sphi 0, %s89
      %s90 = sphi 0, %s87
      %s91 = sphi 0, %s90
      %s107 = sphi 0, %s91
    $region4: #{tpu_custom_call.1} parent=1 // loop_header_branch
      %14 = sbr.rel (%p12) target = $region8
    $region5: #{tpu_custom_call.1} parent=1 // loop_body
      %s16 = ssub.s32 %s11, 1
      %s17 = ssub.s32 %s11, 2
      %s24 = sadd.s32 1, %s19
      %p25 = scmp.ge.s32.totalorder %s24, 4
      %s26 = scalar_select %p25, 0, %s24
      %s27 = sadd.s32 1, %s18
      %s28 = scalar_select %p25, %s27, %s18
      %p29 = scmp.ge.s32.totalorder %s28, 2
      %s30 = scalar_select %p29, 0, %s28
      %s31 = ssub.s32 %s18, %s30
      %s32 = ssub.s32 %s19, %s26
      %s33 = sor.u32 %s31, %s32
      %p34 = scmp.eq.s32.totalorder %s33, 0
      %s36 = sadd.s32 %s35, 1
      %s37 = scalar_select %p34, %s35, %s36
      %p40 = pneg %p34
      %p41 = scmp.eq.s32.totalorder %s11, 7
      %p42 = por %p40, %p41
      %p43 = scmp.ne.s32.totalorder %s35, %s38
      %p44 = scmp.eq.s32.totalorder %s11, 0
      %p45 = por %p43, %p44
      %p46 = scmp.ne.s32.totalorder %s35, %s38
      %p47 = scmp.eq.s32.totalorder %s16, 7
      %p48 = por %p46, %p47
      %p49 = scmp.ne.s32.totalorder %s38, %s39
      %p50 = scmp.eq.s32.totalorder %s16, 0
      %p51 = por %p49, %p50
      %p52 = scmp.ne.s32.totalorder %s38, %s39
      %p53 = scmp.eq.s32.totalorder %s17, 7
      %p54 = por %p52, %p53
      %p56 = scmp.ne.s32.totalorder %s39, %s55
      %p57 = scmp.eq.s32.totalorder %s17, 0
      %p58 = por %p56, %p57
      %s59 = ssub.s32 %s18, %s30
      %p60 = scmp.eq.s32.totalorder %s59, 0
      %s62 = sadd.s32 %s61, 1
      %s63 = scalar_select %p60, %s61, %s62
      %p66 = pneg %p60
      %p67 = scmp.eq.s32.totalorder %s11, 7
      %p68 = por %p66, %p67
      %p69 = scmp.ne.s32.totalorder %s61, %s64
      %p70 = scmp.eq.s32.totalorder %s11, 0
      %p71 = por %p69, %p70
      %p72 = scmp.ne.s32.totalorder %s61, %s64
      %p73 = scmp.eq.s32.totalorder %s16, 7
      %p74 = por %p72, %p73
      %p75 = scmp.ne.s32.totalorder %s64, %s65
      %p76 = scmp.eq.s32.totalorder %s16, 0
      %p77 = por %p75, %p76
      %p78 = scmp.ne.s32.totalorder %s64, %s65
      %p79 = scmp.eq.s32.totalorder %s17, 7
      %p80 = por %p78, %p79
      %p82 = scmp.ne.s32.totalorder %s65, %s81
      %p83 = scmp.eq.s32.totalorder %s17, 0
      %p84 = por %p82, %p83
      %s85 = ssub.s32 %s18, %s30
      %p86 = scmp.eq.s32.totalorder %s85, 0
      %s88 = sadd.s32 %s87, 1
      %s89 = scalar_select %p86, %s87, %s88
      %p92 = pneg %p86
      %p93 = scmp.eq.s32.totalorder %s11, 7
      %p94 = por %p92, %p93
      %p95 = scmp.ne.s32.totalorder %s87, %s90
      %p96 = scmp.eq.s32.totalorder %s11, 0
      %p97 = por %p95, %p96
      %p98 = scmp.ne.s32.totalorder %s87, %s90
      %p99 = scmp.eq.s32.totalorder %s16, 7
      %p100 = por %p98, %p99
      %p101 = scmp.ne.s32.totalorder %s90, %s91
      %p102 = scmp.eq.s32.totalorder %s16, 0
      %p103 = por %p101, %p102
      %p104 = scmp.ne.s32.totalorder %s90, %s91
      %p105 = scmp.eq.s32.totalorder %s17, 7
      %p106 = por %p104, %p105
      %p108 = scmp.ne.s32.totalorder %s91, %s107
      %p109 = scmp.eq.s32.totalorder %s17, 0
      %p110 = por %p108, %p109
      %p111 = scmp.le.s32.totalorder 1, %s11
      %p112 = scmp.lt.s32.totalorder %s11, 9
      %p113 = pnand %p111, %p112
      %p114 = pneg %p113
      // Predicated region
      $region9: #{tpu_custom_call.1} parent=5 // pred_check
        _
      $region10: #{tpu_custom_call.1} parent=5 // pred_check_branch
        %116 = sbr.rel (%p113) target = $region12
      $region11: #{tpu_custom_call.1} parent=5 // pred_region
        %s117 = ssub.s32 %s11, 1
      $region12: #{tpu_custom_call.1} parent=5 // pred_fallthru
        _
      %p118 = scmp.lt.s32.totalorder %s11, 8
      // Predicated region
      $region13: #{tpu_custom_call.1} parent=5 // pred_check
        %p119 = pneg %p118
      $region14: #{tpu_custom_call.1} parent=5 // pred_check_branch
        %121 = sbr.rel (%p119) target = $region16
      $region15: #{tpu_custom_call.1} parent=5 // pred_region
        // Predicated region
        $region17: #{tpu_custom_call.1} parent=15 // pred_check
          %p122 = pneg %p45
        $region18: #{tpu_custom_call.1} parent=15 // pred_check_branch
          %124 = sbr.rel (%p122) target = $region20
        $region19: #{tpu_custom_call.1} parent=15 // pred_region
          %s125 = sand.u32 %s35, 1
          %s126 = scalar_lea.sflag [#allocation3], %s125
          %s127 = sand.u32 %s35, 1
          %s128 = smul.addr %s127, 8
          %s129 = scalar_lea.vmem [#allocation2], %s128
          %s131 = ssub.s32 128, 128
          %132 = vsyncadd %s126, %s131
          %s133 = smul.addr %s18, 4
          %s134 = sadd.s32 %s19, %s133
          %s135 = smul.addr %s134, 128
          %s136 = scalar_lea.hbm %s0, %s135
          %s138 = sshll.u32 %s129, 4
          %s139 = int_to_ptr.vmem [resolvable:$true] %s138
          %141 = dma.hbm_to_vmem [thread:$0]  %s136, 128, %s139, %s126
        $region20: #{tpu_custom_call.1} parent=15 // pred_fallthru
          _
        // Predicated region
        $region21: #{tpu_custom_call.1} parent=15 // pred_check
          %p142 = pneg %p71
        $region22: #{tpu_custom_call.1} parent=15 // pred_check_branch
          %144 = sbr.rel (%p142) target = $region24
        $region23: #{tpu_custom_call.1} parent=15 // pred_region
          %p145 = scmp.lt.s32.totalorder %s18, 1
          %s146 = scalar_select %p145, %s18, 1
          %s147 = smul.addr %s146, 8
          %s148 = scalar_lea.vmem %s1, %s147
        $region24: #{tpu_custom_call.1} parent=15 // pred_fallthru
          _
      $region16: #{tpu_custom_call.1} parent=5 // pred_fallthru
        _
      %p149 = scmp.le.s32.totalorder 1, %s11
      %p150 = scmp.lt.s32.totalorder %s11, 9
      %p151 = pnand %p149, %p150
      %p152 = pneg %p151
      // Predicated region
      $region25: #{tpu_custom_call.1} parent=5 // pred_check
        _
      $region26: #{tpu_custom_call.1} parent=5 // pred_check_branch
        %154 = sbr.rel (%p151) target = $region28
      $region27: #{tpu_custom_call.1} parent=5 // pred_region
        %s155 = ssub.s32 %s11, 1
        %s156 = sand.u32 %s38, 1
        %s157 = scalar_lea.sflag [#allocation3], %s156
        %s158 = sand.u32 %s38, 1
        %s159 = smul.addr %s158, 8
        %s160 = scalar_lea.vmem [#allocation2], %s159
        // Predicated region
        $region29: #{tpu_custom_call.1} parent=27 // pred_check
          %p161 = pneg %p51
        $region30: #{tpu_custom_call.1} parent=27 // pred_check_branch
          %163 = sbr.rel (%p161) target = $region32
        $region31: #{tpu_custom_call.1} parent=27 // pred_region
          %164 = dma.done %s157, 128
        $region32: #{tpu_custom_call.1} parent=27 // pred_fallthru
          _
        %s165 = sand.u32 %s38, 1
        %s166 = scalar_lea.sflag [#allocation3], %s165
        %s167 = sand.u32 %s38, 1
        %s168 = smul.addr %s167, 8
        %s169 = scalar_lea.vmem [#allocation2], %s168
        %p170 = pneg %p51
        %p171 = pneg %p48
        %p172 = scmp.lt.s32.totalorder %s20, 1
        %s173 = scalar_select %p172, %s20, 1
        %s174 = smul.addr %s173, 8
        %s175 = scalar_lea.vmem %s1, %s174
        %p176 = pneg %p77
        %p177 = pneg %p74
        %p178 = pneg %p103
        %p179 = pneg %p100
        %p180 = scmp.lt.s32.totalorder %s20, 1
        %s181 = scalar_select %p180, %s20, 1
        %s182 = smul.addr %s181, 8
        %s183 = scalar_lea.vmem %s2, %s182
        %p184 = scmp.lt.s32.totalorder %s20, 1
        %s185 = scalar_select %p184, %s20, 1
        %s186 = smul.addr %s185, 8
        %s187 = scalar_lea.vmem %s1, %s186
        %p188 = scmp.lt.s32.totalorder %s20, 1
        %s189 = scalar_select %p188, %s20, 1
        %s190 = smul.addr %s189, 8
        %s191 = scalar_lea.vmem %s2, %s190
        %v192 = vld [vmem:[%s187] sm:$0xff]
        %vm193 = vcmp.ne.s32.totalorder %v192, 0
        %p194 = scmp.eq.s32.totalorder %s21, 0
        // Predicated region
        $region33: #{tpu_custom_call.1} parent=27 // pred_check
          %p195 = pneg %p194
        $region34: #{tpu_custom_call.1} parent=27 // pred_check_branch
          %197 = sbr.rel (%p195) target = $region36
        $region35: #{tpu_custom_call.1} parent=27 // pred_region
          %v198 = vsel %vm193, -0.946143, 0.0
          %vm199 = vcmask 7168
          %200 = vst.msk [vmem:[%s191] sm:$0xff] %vm199, %v198
        $region36: #{tpu_custom_call.1} parent=27 // pred_fallthru
          _
        %v201 = vld [vmem:[%s160] sm:$0xff]
        %v202 = vlaneseq
        %v203 = vand.u32 %v202, 127
        %s204 = smul.u32 %s21, 128
        %v205 = vstv %s204
        %v206 = vsub.s32 %v192, %v205
        %p207 = scmp.eq.s32.totalorder %s21, 3
        // Predicated region
        $region37: #{tpu_custom_call.1} parent=27 // pred_check
          %p208 = pneg %p207
        $region38: #{tpu_custom_call.1} parent=27 // pred_check_branch
          %210 = sbr.rel (%p208) target = $region40
        $region39: #{tpu_custom_call.1} parent=27 // pred_region
          %vm211 = vcmp.lt.s32.totalorder %v203, 116
          %v212 = vsel %vm211, %v201, 0.0
          %213 = vset.pattern.permute.xlu0 0
          %214 = vperm.xlu0 %213, %v206
          %v215 = vpop.permute.xlu0 %214
          %vm216 = vcmp.eq.s32.totalorder %v203, %v215
          %v217 = vsel %vm216, -0.9, -0.00020080322
          %v218 = vmul.f32 %v217, %v212
          %219 = vadd.xlane.f32.xlu0 %v218
          %v220 = vpop.xlane.xlu0 %219
          %v221 = vld [vmem:[%s191] sm:$0xff]
          %v222 = vsel %vm193, %v220, 0.0
          %v223 = vadd.f32 %v221, %v222
          %vm224 = vcmask 7168
          %225 = vst.msk [vmem:[%s191] sm:$0xff] %vm224, %v223
        $region40: #{tpu_custom_call.1} parent=27 // pred_fallthru
          _
        %p226 = scmp.ne.s32.totalorder %s21, 3
        // Predicated region
        $region41: #{tpu_custom_call.1} parent=27 // pred_check
          %p227 = pneg %p226
        $region42: #{tpu_custom_call.1} parent=27 // pred_check_branch
          %229 = sbr.rel (%p227) target = $region44
        $region43: #{tpu_custom_call.1} parent=27 // pred_region
          %230 = vset.pattern.permute.xlu0 0
          %231 = vperm.xlu0 %230, %v206
          %v232 = vpop.permute.xlu0 %231
          %vm233 = vcmp.eq.s32.totalorder %v203, %v232
          %v234 = vsel %vm233, -0.9, -0.00020080322
          %v235 = vmul.f32 %v234, %v201
          %236 = vadd.xlane.f32.xlu0 %v235
          %v237 = vpop.xlane.xlu0 %236
          %v238 = vld [vmem:[%s191] sm:$0xff]
          %v239 = vsel %vm193, %v237, 0.0
          %v240 = vadd.f32 %v238, %v239
          %vm241 = vcmask 7168
          %242 = vst.msk [vmem:[%s191] sm:$0xff] %vm241, %v240
        $region44: #{tpu_custom_call.1} parent=27 // pred_fallthru
          _
        // Predicated region
        $region45: #{tpu_custom_call.1} parent=27 // pred_check
          %p243 = pneg %p194
        $region46: #{tpu_custom_call.1} parent=27 // pred_check_branch
          %245 = sbr.rel (%p243) target = $region48
        $region47: #{tpu_custom_call.1} parent=27 // pred_region
          %vm246 = vcmp.eq.s32.totalorder %v203, 0
          %v247 = vsel %vm246, %v201, 0.0
          %248 = vadd.xlane.f32.xlu0 %v247
          %v249 = vpop.xlane.xlu0 %248
          %v250 = vld [vmem:[%s191] sm:$0xff]
          %v251 = vmul.f32 %v249, 0.00020080322
          %v252 = vsel %vm193, %v251, 0.0
          %v253 = vadd.f32 %v250, %v252
          %vm254 = vcmask 7168
          %255 = vst.msk [vmem:[%s191] sm:$0xff] %vm254, %v253
        $region48: #{tpu_custom_call.1} parent=27 // pred_fallthru
          _
        %p256 = scmp.lt.s32.totalorder %s20, 1
        %s257 = scalar_select %p256, %s20, 1
        %s258 = smul.addr %s257, 8
        %s259 = scalar_lea.vmem %s2, %s258
        // Predicated region
        $region49: #{tpu_custom_call.1} parent=27 // pred_check
          %p260 = pneg %p100
        $region50: #{tpu_custom_call.1} parent=27 // pred_check_branch
          %262 = sbr.rel (%p260) target = $region52
        $region51: #{tpu_custom_call.1} parent=27 // pred_region
          _
        $region52: #{tpu_custom_call.1} parent=27 // pred_fallthru
          _
      $region28: #{tpu_custom_call.1} parent=5 // pred_fallthru
        _
      %p263 = scmp.le.s32.totalorder 2, %s11
      // Predicated region
      $region53: #{tpu_custom_call.1} parent=5 // pred_check
        %p264 = pneg %p263
      $region54: #{tpu_custom_call.1} parent=5 // pred_check_branch
        %266 = sbr.rel (%p264) target = $region56
      $region55: #{tpu_custom_call.1} parent=5 // pred_region
        %s267 = ssub.s32 %s11, 2
        // Predicated region
        $region57: #{tpu_custom_call.1} parent=55 // pred_check
          %p268 = pneg %p106
        $region58: #{tpu_custom_call.1} parent=55 // pred_check_branch
          %270 = sbr.rel (%p268) target = $region60
        $region59: #{tpu_custom_call.1} parent=55 // pred_region
          %p271 = scmp.lt.s32.totalorder %s22, 1
          %s272 = scalar_select %p271, %s22, 1
          %s273 = smul.addr %s272, 8
          %s274 = scalar_lea.vmem %s2, %s273
        $region60: #{tpu_custom_call.1} parent=55 // pred_fallthru
          _
      $region56: #{tpu_custom_call.1} parent=5 // pred_fallthru
        _
    $region6: #{tpu_custom_call.1} parent=1 // loop_footer
      %s15 = sadd.s32 1, %s11
    $region7: #{tpu_custom_call.1} parent=1 // loop_footer_branch
      %10 = sbr.rel target = $region3
    $region8: #{tpu_custom_call.1} parent=1 // loop_exit
      _
    %275 = vsyncpa [#allocation3], 1
    %s276 = scalar_lea.sflag [#allocation3], 1
    %277 = vsyncpa %s276, 1

</llo_original>
